<compile_context>
chip_gen: v7x
topology: tpu7x:2x2x1
jax: 0.10.0
libtpu: 0.0.40
codegen_flags: <defaults>
</compile_context>

<pallas_src>
import functools

import numpy as np
import jax
import jax.numpy as jnp
from jax.experimental import pallas as pl
from jax.experimental.pallas import tpu as pltpu  # noqa: F401  (kept for CompilerParams tuning at larger shapes)

_EPS = 1e-5


# ----------------------------------------------------------------------------
# In-kernel activation helpers (exp + approx reciprocal -> EUP slot).
# ----------------------------------------------------------------------------
def _sigmoid(z):
    return pl.reciprocal(1.0 + jnp.exp(-z), approx=True)


def _swish(z):
    return z * _sigmoid(z)


# ----------------------------------------------------------------------------
# Constant selection matrices, built host-side from static shapes only.
# They encode "same" padding, stride and the batch blocking of the (C, B*L)
# layout so every conv / pool / SE step becomes a plain GEMM inside the kernel.
# ----------------------------------------------------------------------------
def _conv_gather(lin, ksize, stride, batch):
    """MyConv1dPadSame gather: G[b*lin+i, k*B*lout + b*lout + l] = 1 iff
    i == l*stride + k - left (out-of-range -> zero pad contribution)."""
    lout = -(-lin // stride)
    pad = max(0, (lout - 1) * stride + ksize - lin)
    left = pad // 2
    g = np.zeros((batch * lin, ksize * batch * lout), np.float32)
    for k in range(ksize):
        for b in range(batch):
            for l in range(lout):
                i = l * stride + k - left
                if 0 <= i < lin:
                    g[b * lin + i, k * batch * lout + b * lout + l] = 1.0
    return jnp.asarray(g), lout


def _pool_gather(lin, ksize, batch):
    """MyMaxPool1dPadSame: zero-pad (k-1) (left=(k-1)//2), MaxPool1d(k), stride k."""
    lout = -(-lin // ksize)
    left = (ksize - 1) // 2
    g = np.zeros((batch * lin, ksize * batch * lout), np.float32)
    for k in range(ksize):
        for b in range(batch):
            for l in range(lout):
                i = l * ksize + k - left
                if 0 <= i < lin:
                    g[b * lin + i, k * batch * lout + b * lout + l] = 1.0
    return jnp.asarray(g), lout


def _mean_matrix(lout, batch):
    m = np.zeros((batch * lout, batch), np.float32)
    for b in range(batch):
        m[b * lout:(b + 1) * lout, b] = 1.0 / lout
    return jnp.asarray(m)


def _expand_matrix(lout, batch):
    e = np.zeros((batch, batch * lout), np.float32)
    for b in range(batch):
        e[b, b * lout:(b + 1) * lout] = 1.0
    return jnp.asarray(e)


def _chpad_matrix(cin, cout):
    p = np.zeros((cout, cin), np.float32)
    left = (cout - cin) // 2
    p[left:left + cin, :] = np.eye(cin, dtype=np.float32)
    return jnp.asarray(p)


# ----------------------------------------------------------------------------
# Kernel 1: fused stem  (conv "same" stride-2  + folded BN + Swish)
# ----------------------------------------------------------------------------
def _stem_kernel(x_ref, g_ref, w_ref, s_ref, t_ref, o_ref, *, ksize, ncols):
    # x: (Cin, B*Lin)   g: (B*Lin, K*B*Lout)   w: (K, Cout, Cin)
    y = jnp.dot(x_ref[...], g_ref[...], preferred_element_type=jnp.float32)
    acc = jnp.dot(w_ref[0], y[:, :ncols], preferred_element_type=jnp.float32)
    for k in range(1, ksize):
        acc = acc + jnp.dot(w_ref[k], y[:, k * ncols:(k + 1) * ncols],
                            preferred_element_type=jnp.float32)
    z = acc * s_ref[...] + t_ref[...]        # conv bias folded into BN shift
    o_ref[...] = _swish(z)


# ----------------------------------------------------------------------------
# Kernel 2: one fused BasicBlock
# ----------------------------------------------------------------------------
def _block_kernel(x_ref, s1_ref, t1_ref, w1_ref, s2_ref, t2_ref,
                  w2_ref, g2_ref, s3_ref, t3_ref, w3_ref, b3_ref,
                  wse1_ref, bse1_ref, wse2_ref, bse2_ref,
                  gp_ref, pch_ref, mcol_ref, ecol_ref, o_ref,
                  *, ksize, pool_k, first_block, pad_channels, ncols):
    x = x_ref[...]                                       # (Cin, B*Lin)

    # --- pre-activation BN1 + Swish (skipped for the very first block) -----
    if first_block:
        h = x
    else:
        h = _swish(x * s1_ref[...] + t1_ref[...])

    # --- conv1 (1x1) + BN2 + Swish  (conv1 bias folded into BN2 shift) -----
    h = _swish(jnp.dot(w1_ref[...], h, preferred_element_type=jnp.float32)
               * s2_ref[...] + t2_ref[...])              # (mid, B*Lin)

    # --- conv2 (grouped, K taps, stride) ------------------------------------
    # gather matmul builds all shifted/strided taps at once:
    y = jnp.dot(h, g2_ref[...], preferred_element_type=jnp.float32)  # (mid, K*B*Lout)
    # K GEMMs with group-block-diagonal packed weights (full `mid` contraction)
    acc = jnp.dot(w2_ref[0], y[:, :ncols], preferred_element_type=jnp.float32)
    for k in range(1, ksize):
        acc = acc + jnp.dot(w2_ref[k], y[:, k * ncols:(k + 1) * ncols],
                            preferred_element_type=jnp.float32)
    # BN3 + Swish (conv2 bias folded into BN3 shift)
    h = _swish(acc * s3_ref[...] + t3_ref[...])          # (mid, B*Lout)

    # --- conv3 (1x1) + bias --------------------------------------------------
    out = jnp.dot(w3_ref[...], h, preferred_element_type=jnp.float32) + b3_ref[...]

    # --- Squeeze-Excite ------------------------------------------------------
    m = jnp.dot(out, mcol_ref[...], preferred_element_type=jnp.float32)   # (Cout, B)
    h1 = _swish(jnp.dot(wse1_ref[...], m, preferred_element_type=jnp.float32)
                + bse1_ref[...])
    s = _sigmoid(jnp.dot(wse2_ref[...], h1, preferred_element_type=jnp.float32)
                 + bse2_ref[...])                         # (Cout, B)
    out = out * jnp.dot(s, ecol_ref[...], preferred_element_type=jnp.float32)

    # --- identity branch: "same" max-pool (zero pad) + channel zero-pad -----
    if pool_k == 1:
        ident = x
    else:
        yid = jnp.dot(x, gp_ref[...], preferred_element_type=jnp.float32)  # (Cin, pool_k*B*Lout)
        ident = yid[:, :ncols]
        for k in range(1, pool_k):
            ident = jnp.maximum(ident, yid[:, k * ncols:(k + 1) * ncols])
    if pad_channels:
        ident = jnp.dot(pch_ref[...], ident, preferred_element_type=jnp.float32)

    o_ref[...] = out + ident


# ----------------------------------------------------------------------------
# Kernel 3: fused head (global mean over L + final Linear)
# ----------------------------------------------------------------------------
def _head_kernel(x_ref, mcol_ref, w_ref, b_ref, o_ref):
    m = jnp.dot(x_ref[...], mcol_ref[...], preferred_element_type=jnp.float32)  # (C, B)
    o_ref[...] = jnp.dot(w_ref[...], m, preferred_element_type=jnp.float32) + b_ref[...]


# ----------------------------------------------------------------------------
# Parameter init (synthetic, deterministic) — mirrors the PyTorch module.
# ----------------------------------------------------------------------------
def _init_conv(key, cout, cin_g, k):
    kw, kb = jax.random.split(key)
    w = jax.random.normal(kw, (cout, cin_g, k), jnp.float32) * 0.1
    b = jax.random.normal(kb, (cout,), jnp.float32) * 0.1
    return w, b


def _init_linear(key, cout, cin):
    kw, kb = jax.random.split(key)
    w = jax.random.normal(kw, (cout, cin), jnp.float32) * 0.1
    b = jax.random.normal(kb, (cout,), jnp.float32) * 0.1
    return w, b


def _init_bn(c):
    # PyTorch defaults: gamma=1, beta=0, running_mean=0, running_var=1
    return dict(gamma=jnp.ones((c,), jnp.float32),
                beta=jnp.zeros((c,), jnp.float32),
                mean=jnp.zeros((c,), jnp.float32),
                var=jnp.ones((c,), jnp.float32))


def init_net1d_params(key, *, in_channels, base_filters, ratio, filter_list,
                      m_blocks_list, kernel_size, stride, groups_width,
                      n_classes):
    keys = iter(jax.random.split(key, 256))
    params = {}
    params["first_conv"] = _init_conv(next(keys), base_filters, in_channels,
                                      kernel_size)
    params["first_bn"] = _init_bn(base_filters)
    stages = []
    in_ch = base_filters
    for i_stage, out_ch in enumerate(filter_list):
        groups = out_ch // groups_width
        blocks = []
        for i_block in range(m_blocks_list[i_stage]):
            is_first_block = (i_stage == 0 and i_block == 0)
            downsample = (i_block == 0)
            tmp_in = in_ch if i_block == 0 else out_ch
            mid = int(out_ch * ratio)
            blk = dict(
                meta=dict(in_ch=tmp_in, out_ch=out_ch, mid=mid, groups=groups,
                          kernel_size=kernel_size,
                          stride=(stride if downsample else 1),
                          downsample=downsample,
                          is_first_block=is_first_block),
                bn1=_init_bn(tmp_in),
                conv1=_init_conv(next(keys), mid, tmp_in, 1),
                bn2=_init_bn(mid),
                conv2=_init_conv(next(keys), mid, mid // groups, kernel_size),
                bn3=_init_bn(mid),
                conv3=_init_conv(next(keys), out_ch, mid, 1),
                se_fc1=_init_linear(next(keys), out_ch // 2, out_ch),
                se_fc2=_init_linear(next(keys), out_ch, out_ch // 2),
            )
            blocks.append(blk)
        stages.append(blocks)
        in_ch = out_ch
    params["stages"] = stages
    params["fc"] = _init_linear(next(keys), n_classes, in_ch)
    return params


# ----------------------------------------------------------------------------
# One-time parameter preparation: fold BN + conv biases, pack grouped weights.
# (Hoisted out of the forward path, per the review.)
# ----------------------------------------------------------------------------
def _fold_bn(bn):
    s = bn["gamma"] / jnp.sqrt(bn["var"] + _EPS)
    t = bn["beta"] - bn["mean"] * s
    return s, t


def prepare_net1d(params):
    plan = {}
    # ---- stem: fold conv bias into BN shift, tap-major weight ----
    w, b = params["first_conv"]
    s, t = _fold_bn(params["first_bn"])
    cout, _, k = w.shape
    plan["stem"] = dict(
        w=jnp.transpose(w, (2, 0, 1)).astype(jnp.float32),     # (K, Cout, Cin)
        scale=s.reshape(cout, 1),
        shift=(t + b * s).reshape(cout, 1),
        kernel_size=int(k), stride=2,
    )
    # ---- blocks ----
    stages = []
    for blocks in params["stages"]:
        pblocks = []
        for blk in blocks:
            meta = blk["meta"]
            mid, groups, ks = meta["mid"], meta["groups"], meta["kernel_size"]
            assert mid % groups == 0
            cg = mid // groups       # input channels per group
            cog = mid // groups      # output channels per group
            s1, t1 = _fold_bn(blk["bn1"])
            w1, b1 = blk["conv1"]
            s2, t2 = _fold_bn(blk["bn2"])
            w2, b2 = blk["conv2"]
            s3, t3 = _fold_bn(blk["bn3"])
            w3, b3 = blk["conv3"]
            wse1, bse1 = blk["se_fc1"]
            wse2, bse2 = blk["se_fc2"]
            # group-expanded tap-major conv2 weight: (K, mid, mid), block-diag
            w2e = jnp.zeros((ks, mid, mid), jnp.float32)
            for g in range(groups):
                blk_w = jnp.transpose(w2[g * cog:(g + 1) * cog], (2, 0, 1))  # (K, Cog, Cg)
                w2e = w2e.at[:, g * cog:(g + 1) * cog,
                             g * cg:(g + 1) * cg].set(blk_w)
            pblocks.append(dict(
                meta=meta,
                s1=s1.reshape(-1, 1), t1=t1.reshape(-1, 1),
                w1=w1[:, :, 0].astype(jnp.float32),             # (mid, Cin)
                s2=s2.reshape(-1, 1), t2=(t2 + b1 * s2).reshape(-1, 1),
                w2e=w2e,
                s3=s3.reshape(-1, 1), t3=(t3 + b2 * s3).reshape(-1, 1),
                w3=w3[:, :, 0].astype(jnp.float32),             # (Cout, mid)
                b3=b3.reshape(-1, 1),
                wse1=wse1.astype(jnp.float32), bse1=bse1.reshape(-1, 1),
                wse2=wse2.astype(jnp.float32), bse2=bse2.reshape(-1, 1),
            ))
        stages.append(pblocks)
    plan["stages"] = stages
    fc_w, fc_b = params["fc"]
    plan["fc_w"] = fc_w.astype(jnp.float32)                     # (n_classes, C)
    plan["fc_b"] = fc_b.reshape(-1, 1)
    return plan


# ----------------------------------------------------------------------------
# Forward pass (5 pallas_calls total for the demo config).
# ----------------------------------------------------------------------------
def _block_forward(h, blk, batch):
    meta = blk["meta"]
    lin = h.shape[1] // batch
    ksize = meta["kernel_size"]
    stride = meta["stride"]
    g2, lout = _conv_gather(lin, ksize, stride, batch)
    ncols = batch * lout
    if meta["downsample"] and stride > 1:
        gp, lp = _pool_gather(lin, stride, batch)
        assert lp == lout
        pool_k = stride
    else:
        gp = jnp.zeros((1, 1), jnp.float32)   # unused dummy
        pool_k = 1
    pad_channels = meta["out_ch"] != meta["in_ch"]
    pch = (_chpad_matrix(meta["in_ch"], meta["out_ch"]) if pad_channels
           else jnp.zeros((1, 1), jnp.float32))
    mcol = _mean_matrix(lout, batch)
    ecol = _expand_matrix(lout, batch)
    kernel = functools.partial(
        _block_kernel, ksize=ksize, pool_k=pool_k,
        first_block=meta["is_first_block"], pad_channels=pad_channels,
        ncols=ncols)
    return pl.pallas_call(
        kernel,
        out_shape=jax.ShapeDtypeStruct((meta["out_ch"], ncols), jnp.float32),
    )(h, blk["s1"], blk["t1"], blk["w1"], blk["s2"], blk["t2"],
      blk["w2e"], g2, blk["s3"], blk["t3"], blk["w3"], blk["b3"],
      blk["wse1"], blk["bse1"], blk["wse2"], blk["bse2"],
      gp, pch, mcol, ecol)


def net1d_forward(x, plan):
    batch, cin, lin = x.shape
    # one-time layout change: (B, C, L) -> lane-dense (C, B*L)
    h = jnp.transpose(x, (1, 0, 2)).reshape(cin, batch * lin).astype(jnp.float32)

    st = plan["stem"]
    ksize = st["kernel_size"]
    g, lout = _conv_gather(lin, ksize, st["stride"], batch)
    ncols = batch * lout
    cout = st["w"].shape[1]
    stem = functools.partial(_stem_kernel, ksize=ksize, ncols=ncols)
    h = pl.pallas_call(
        stem, out_shape=jax.ShapeDtypeStruct((cout, ncols), jnp.float32),
    )(h, g, st["w"], st["scale"], st["shift"])

    for blocks in plan["stages"]:
        for blk in blocks:
            h = _block_forward(h, blk, batch)

    lfin = h.shape[1] // batch
    mcol = _mean_matrix(lfin, batch)
    nclass = plan["fc_w"].shape[0]
    logits = pl.pallas_call(
        _head_kernel,
        out_shape=jax.ShapeDtypeStruct((nclass, batch), jnp.float32),
    )(h, mcol, plan["fc_w"], plan["fc_b"])
    return logits.T                                           # (B, n_classes)


if __name__ == "__main__":
    key = jax.random.PRNGKey(0)
    kx, kp = jax.random.split(key)

    B, C_in, L = 2, 4, 16
    x = jax.random.normal(kx, (B, C_in, L), jnp.float32)

    params = init_net1d_params(
        kp,
        in_channels=C_in,
        base_filters=8,
        ratio=1.0,
        filter_list=(8, 16),
        m_blocks_list=(2, 1),
        kernel_size=3,
        stride=2,
        groups_width=4,
        n_classes=5,
    )
    plan = prepare_net1d(params)

    logits = net1d_forward(x, plan)
    jax.block_until_ready(logits)
    assert logits.shape == (B, 5), logits.shape
    assert bool(jnp.all(jnp.isfinite(logits)))
    print("KERNEL_OK")
</pallas_src>

<mosaic_0001>
module attributes {stable_mosaic.version = 11 : i64} {
  func.func @_stem_kernel(%arg0: memref<4x32xf32, #tpu.memory_space<vmem>>, %arg1: memref<32x48xf32, #tpu.memory_space<vmem>>, %arg2: memref<3x8x4xf32, #tpu.memory_space<vmem>>, %arg3: memref<8x1xf32, #tpu.memory_space<vmem>>, %arg4: memref<8x1xf32, #tpu.memory_space<vmem>>, %arg5: memref<8x16xf32, #tpu.memory_space<vmem>>) attributes {dimension_semantics = [], scalar_prefetch = 0 : i64, scratch_operands = 0 : i64, tpu.core_type = #tpu.core_type<tc>} {
    %c0 = arith.constant 0 : index
    %c0_0 = arith.constant 0 : index
    %0 = vector.load %arg0[%c0, %c0_0] : memref<4x32xf32, #tpu.memory_space<vmem>>, vector<4x32xf32>
    %c0_1 = arith.constant 0 : index
    %c0_2 = arith.constant 0 : index
    %1 = vector.load %arg1[%c0_1, %c0_2] : memref<32x48xf32, #tpu.memory_space<vmem>>, vector<32x48xf32>
    %cst = arith.constant dense<0.000000e+00> : vector<4x48xf32>
    %2 = tpu.matmul %0, %1, %cst {dimension_numbers = #tpu.dot_dimension_numbers<[1], [0], [0], [1], [0, 0, 1, 1], [], []>} : vector<4x32xf32>, vector<32x48xf32>, vector<4x48xf32> -> vector<4x48xf32>
    %c0_3 = arith.constant 0 : index
    %c0_4 = arith.constant 0 : index
    %c0_5 = arith.constant 0 : index
    %3 = vector.load %arg2[%c0_3, %c0_4, %c0_5] : memref<3x8x4xf32, #tpu.memory_space<vmem>>, vector<1x8x4xf32>
    %4 = vector.shape_cast %3 : vector<1x8x4xf32> to vector<8x4xf32>
    %5 = vector.extract_strided_slice %2 {offsets = [0, 0], sizes = [4, 16], strides = [1, 1]} : vector<4x48xf32> to vector<4x16xf32>
    %cst_6 = arith.constant dense<0.000000e+00> : vector<8x16xf32>
    %6 = tpu.matmul %4, %5, %cst_6 {dimension_numbers = #tpu.dot_dimension_numbers<[1], [0], [0], [1], [0, 0, 1, 1], [], []>} : vector<8x4xf32>, vector<4x16xf32>, vector<8x16xf32> -> vector<8x16xf32>
    %c1 = arith.constant 1 : index
    %c0_7 = arith.constant 0 : index
    %c0_8 = arith.constant 0 : index
    %7 = vector.load %arg2[%c1, %c0_7, %c0_8] : memref<3x8x4xf32, #tpu.memory_space<vmem>>, vector<1x8x4xf32>
    %8 = vector.shape_cast %7 : vector<1x8x4xf32> to vector<8x4xf32>
    %9 = vector.extract_strided_slice %2 {offsets = [0, 16], sizes = [4, 16], strides = [1, 1]} : vector<4x48xf32> to vector<4x16xf32>
    %cst_9 = arith.constant dense<0.000000e+00> : vector<8x16xf32>
    %10 = tpu.matmul %8, %9, %cst_9 {dimension_numbers = #tpu.dot_dimension_numbers<[1], [0], [0], [1], [0, 0, 1, 1], [], []>} : vector<8x4xf32>, vector<4x16xf32>, vector<8x16xf32> -> vector<8x16xf32>
    %11 = arith.addf %6, %10 : vector<8x16xf32>
    %c2 = arith.constant 2 : index
    %c0_10 = arith.constant 0 : index
    %c0_11 = arith.constant 0 : index
    %12 = vector.load %arg2[%c2, %c0_10, %c0_11] : memref<3x8x4xf32, #tpu.memory_space<vmem>>, vector<1x8x4xf32>
    %13 = vector.shape_cast %12 : vector<1x8x4xf32> to vector<8x4xf32>
    %14 = vector.extract_strided_slice %2 {offsets = [0, 32], sizes = [4, 16], strides = [1, 1]} : vector<4x48xf32> to vector<4x16xf32>
    %cst_12 = arith.constant dense<0.000000e+00> : vector<8x16xf32>
    %15 = tpu.matmul %13, %14, %cst_12 {dimension_numbers = #tpu.dot_dimension_numbers<[1], [0], [0], [1], [0, 0, 1, 1], [], []>} : vector<8x4xf32>, vector<4x16xf32>, vector<8x16xf32> -> vector<8x16xf32>
    %16 = arith.addf %11, %15 : vector<8x16xf32>
    %c0_13 = arith.constant 0 : index
    %c0_14 = arith.constant 0 : index
    %17 = vector.load %arg3[%c0_13, %c0_14] : memref<8x1xf32, #tpu.memory_space<vmem>>, vector<8x1xf32>
    %18 = vector.broadcast %17 : vector<8x1xf32> to vector<8x16xf32>
    %19 = arith.mulf %16, %18 : vector<8x16xf32>
    %c0_15 = arith.constant 0 : index
    %c0_16 = arith.constant 0 : index
    %20 = vector.load %arg4[%c0_15, %c0_16] : memref<8x1xf32, #tpu.memory_space<vmem>>, vector<8x1xf32>
    %21 = vector.broadcast %20 : vector<8x1xf32> to vector<8x16xf32>
    %22 = arith.addf %19, %21 : vector<8x16xf32>
    %cst_17 = arith.constant 0.000000e+00 : f32
    %23 = vector.broadcast %cst_17 : f32 to vector<8x16xf32>
    %24 = arith.subf %23, %22 : vector<8x16xf32>
    %25 = math.exp %24 : vector<8x16xf32>
    %cst_18 = arith.constant 1.000000e+00 : f32
    %26 = vector.broadcast %cst_18 : f32 to vector<8x16xf32>
    %27 = arith.addf %26, %25 : vector<8x16xf32>
    %28 = tpu.reciprocal %27 {approx = true} : vector<8x16xf32> -> vector<8x16xf32>
    %29 = arith.mulf %22, %28 : vector<8x16xf32>
    %c0_19 = arith.constant 0 : index
    %c0_20 = arith.constant 0 : index
    %30 = vector.load %arg5[%c0_19, %c0_20] : memref<8x16xf32, #tpu.memory_space<vmem>>, vector<8x16xf32>
    tpu.vector_store %arg5[%c0_19, %c0_20], %29 {strides = array<i32>} : memref<8x16xf32, #tpu.memory_space<vmem>>, vector<8x16xf32>,
    return
  }
}

</mosaic_0001>

<llo_original>
// kernel: tpu_custom_call.1
$region0: #{tpu_custom_call.1}
  #allocation0 [shape = 'u32[]', space=smem, size = 0x4, offset = 0x4, fixed_abs, tag = 'smem constant byte address 0x4 - core index']
  #allocation1 [shape = 'u32[144,128]{1,0:T(1,128)}', space=vmem, size = 0x12000, scoped, tag = 'internal scratch']
  %s0 = inlined_call_operand.vmem [shape: f32[4,32], index: 0, kind: input, shape index: {}]
  %s1 = inlined_call_operand.vmem [shape: f32[32,48], index: 1, kind: input, shape index: {}]
  %s2 = inlined_call_operand.vmem [shape: f32[3,8,4], index: 2, kind: input, shape index: {}]
  %s3 = inlined_call_operand.vmem [shape: f32[8,1], index: 3, kind: input, shape index: {}]
  %s4 = inlined_call_operand.vmem [shape: f32[8,1], index: 4, kind: input, shape index: {}]
  %s5 = inlined_call_operand.hbm [shape: f32[8,16], index: 5, kind: output, shape index: {}]
  %s6 = sld [smem:[#allocation0]]
  $region30: #{tpu_custom_call.1} parent=0
    _
  %s8 = ssub.s32 1, %s6
  %s9 = scalar_select 0, %s8, %s6
  $region1: #{tpu_custom_call.1} parent=0
    #allocation2 [shape = 'u8[4096]{0}', space=vmem, size = 0x1000, scoped, tag = 'output window, operand 0, single buffered']
    #allocation3 [shape = 's32[1]{0}', space=sflag, size = 0x4, scoped, tag = 'scoped memory for tpu_custom_call.1']
    %10 = vsyncpa [#allocation3], 0
    // Predicated region
    $region2: #{tpu_custom_call.1} parent=1 // pred_check
      _
    $region3: #{tpu_custom_call.1} parent=1 // pred_check_branch
      %12 = sbr.rel (0) target = $region5
    $region4: #{tpu_custom_call.1} parent=1 // pred_region
      _
    $region5: #{tpu_custom_call.1} parent=1 // pred_fallthru
      _
    // Predicated region
    $region6: #{tpu_custom_call.1} parent=1 // pred_check
      _
    $region7: #{tpu_custom_call.1} parent=1 // pred_check_branch
      %14 = sbr.rel (0) target = $region9
    $region8: #{tpu_custom_call.1} parent=1 // pred_region
      _
    $region9: #{tpu_custom_call.1} parent=1 // pred_fallthru
      _
    // Predicated region
    $region10: #{tpu_custom_call.1} parent=1 // pred_check
      _
    $region11: #{tpu_custom_call.1} parent=1 // pred_check_branch
      %16 = sbr.rel (0) target = $region13
    $region12: #{tpu_custom_call.1} parent=1 // pred_region
      _
    $region13: #{tpu_custom_call.1} parent=1 // pred_fallthru
      _
    // Predicated region
    $region14: #{tpu_custom_call.1} parent=1 // pred_check
      _
    $region15: #{tpu_custom_call.1} parent=1 // pred_check_branch
      %18 = sbr.rel (0) target = $region17
    $region16: #{tpu_custom_call.1} parent=1 // pred_region
      _
    $region17: #{tpu_custom_call.1} parent=1 // pred_fallthru
      _
    // Predicated region
    $region18: #{tpu_custom_call.1} parent=1 // pred_check
      _
    $region19: #{tpu_custom_call.1} parent=1 // pred_check_branch
      %20 = sbr.rel (0) target = $region21
    $region20: #{tpu_custom_call.1} parent=1 // pred_region
      _
    $region21: #{tpu_custom_call.1} parent=1 // pred_fallthru
      _
    %v21 = vld [vmem:[%s0] sm:$0xf]
    %v22 = vld [vmem:[%s1] sm:$0xff]
    %v23 = vld [vmem:[%s1 + $0x8] sm:$0xff]
    %v24 = vld [vmem:[%s1 + $0x10] sm:$0xff]
    %v25 = vld [vmem:[%s1 + $0x18] sm:$0xff]
    %vm26 = vcmask 261120
    %v28 = vsel %vm26, %v21, 0
    %30 = vmatprep.subr.mxu0 0.0
    %31 = vmatpush1.msra.mxu0 %v22
    %32 = vmatprep.subr.mxu0 0.0
    %33 = vmatpush1.msra.mxu0 %v23
    %34 = vmatprep.subr.mxu0 0.0
    %35 = vmatpush1.msra.mxu0 %v24
    %36 = vmatprep.subr.mxu0 0.0
    %37 = vmatpush1.msra.mxu0 %v25
    %38 = vmatprep.subr.mxu0 0.0
    %39 = vmatpush1.msra.mxu0 0.0
    %40 = vmatprep.subr.mxu0 0.0
    %41 = vmatpush1.msra.mxu0 0.0
    %42 = vmatprep.subr.mxu0 0.0
    %43 = vmatpush1.msra.mxu0 0.0
    %44 = vmatprep.subr.mxu0 0.0
    %45 = vmatpush1.msra.mxu0 0.0
    %46 = vmatprep.subr.mxu0 0.0
    %47 = vmatpush1.msra.mxu0 0.0
    %48 = vmatprep.subr.mxu0 0.0
    %49 = vmatpush1.msra.mxu0 0.0
    %50 = vmatprep.subr.mxu0 0.0
    %51 = vmatpush1.msra.mxu0 0.0
    %52 = vmatprep.subr.mxu0 0.0
    %53 = vmatpush1.msra.mxu0 0.0
    %54 = vmatprep.subr.mxu0 0.0
    %55 = vmatpush1.msra.mxu0 0.0
    %56 = vmatprep.subr.mxu0 0.0
    %57 = vmatpush1.msra.mxu0 0.0
    %58 = vmatprep.subr.mxu0 0.0
    %59 = vmatpush1.msra.mxu0 0.0
    %60 = vmatprep.subr.mxu0 0.0
    %61 = vmatpush1.msra.mxu0 0.0
    %62 = vmatprep.subr.mxu0 0.0
    %63 = vmatpush1.msra.mxu0 0.0
    %64 = vmatprep.subr.mxu0 0.0
    %65 = vmatpush1.msra.mxu0 0.0
    %66 = vmatprep.subr.mxu0 0.0
    %67 = vmatpush1.msra.mxu0 0.0
    %68 = vmatprep.subr.mxu0 0.0
    %69 = vmatpush1.msra.mxu0 0.0
    %70 = vmatprep.subr.mxu0 0.0
    %71 = vmatpush1.msra.mxu0 0.0
    %72 = vmatprep.subr.mxu0 0.0
    %73 = vmatpush1.msra.mxu0 0.0
    %74 = vmatprep.subr.mxu0 0.0
    %75 = vmatpush1.msra.mxu0 0.0
    %76 = vmatprep.subr.mxu0 0.0
    %77 = vmatpush1.msra.mxu0 0.0
    %78 = vmatprep.subr.mxu0 0.0
    %79 = vmatpush1.msra.mxu0 0.0
    %80 = vmatprep.subr.mxu0 0.0
    %81 = vmatpush1.msra.mxu0 0.0
    %82 = vmatprep.subr.mxu0 0.0
    %83 = vmatpush1.msra.mxu0 0.0
    %84 = vmatprep.subr.mxu0 0.0
    %85 = vmatpush1.msra.mxu0 0.0
    %86 = vmatprep.subr.mxu0 0.0
    %87 = vmatpush1.msra.mxu0 0.0
    %88 = vmatprep.subr.mxu0 0.0
    %89 = vmatpush1.msra.mxu0 0.0
    %90 = vmatprep.subr.mxu0 0.0
    %91 = vmatpush1.msra.mxu0 0.0
    %92 = vmatprep.subr.mxu0 0.0
    %93 = vmatpush1.msra.mxu0 0.0
    %94 = vmatprep.mubr.f32.mxu0 0.0
    %95 = vmatmul.mubr.f32.gmra.mrb[0].mxu0 %v28
    %v96 = vpop.f32.mrb[0].mxu0
    %v97 = vadd.f32 0.0, %v96
    %v98 = vpop.f32.mrb[0].mxu0
    %99 = vdwg.mxu0
    %v100 = vld [vmem:[%s2] sm:$0xff]
    %s101 = scalar_lea.vmem %s2, 8
    %v102 = vld [vmem:[%s101] sm:$0xff]
    %104 = vrot.lane.b32.xlu0 %v97, 112
    %v105 = vpop.permute.xlu0 %104
    %vm106 = vcmask 31744
    %v108 = vsel %vm106, %v102, 0
    %vm110 = vcmask 1043456
    %v111 = vsel %vm110, %v105, 0
    %113 = vmatprep.subr.mxu0 0.0
    %114 = vmatpush1.msra.mxu0 %v111
    %115 = vmatprep.subr.mxu0 0.0
    %116 = vmatpush1.msra.mxu0 0.0
    %117 = vmatprep.subr.mxu0 0.0
    %118 = vmatpush1.msra.mxu0 0.0
    %119 = vmatprep.subr.mxu0 0.0
    %120 = vmatpush1.msra.mxu0 0.0
    %121 = vmatprep.subr.mxu0 0.0
    %122 = vmatpush1.msra.mxu0 0.0
    %123 = vmatprep.subr.mxu0 0.0
    %124 = vmatpush1.msra.mxu0 0.0
    %125 = vmatprep.subr.mxu0 0.0
    %126 = vmatpush1.msra.mxu0 0.0
    %127 = vmatprep.subr.mxu0 0.0
    %128 = vmatpush1.msra.mxu0 0.0
    %129 = vmatprep.subr.mxu0 0.0
    %130 = vmatpush1.msra.mxu0 0.0
    %131 = vmatprep.subr.mxu0 0.0
    %132 = vmatpush1.msra.mxu0 0.0
    %133 = vmatprep.subr.mxu0 0.0
    %134 = vmatpush1.msra.mxu0 0.0
    %135 = vmatprep.subr.mxu0 0.0
    %136 = vmatpush1.msra.mxu0 0.0
    %137 = vmatprep.subr.mxu0 0.0
    %138 = vmatpush1.msra.mxu0 0.0
    %139 = vmatprep.subr.mxu0 0.0
    %140 = vmatpush1.msra.mxu0 0.0
    %141 = vmatprep.subr.mxu0 0.0
    %142 = vmatpush1.msra.mxu0 0.0
    %143 = vmatprep.subr.mxu0 0.0
    %144 = vmatpush1.msra.mxu0 0.0
    %145 = vmatprep.subr.mxu0 0.0
    %146 = vmatpush1.msra.mxu0 0.0
    %147 = vmatprep.subr.mxu0 0.0
    %148 = vmatpush1.msra.mxu0 0.0
    %149 = vmatprep.subr.mxu0 0.0
    %150 = vmatpush1.msra.mxu0 0.0
    %151 = vmatprep.subr.mxu0 0.0
    %152 = vmatpush1.msra.mxu0 0.0
    %153 = vmatprep.subr.mxu0 0.0
    %154 = vmatpush1.msra.mxu0 0.0
    %155 = vmatprep.subr.mxu0 0.0
    %156 = vmatpush1.msra.mxu0 0.0
    %157 = vmatprep.subr.mxu0 0.0
    %158 = vmatpush1.msra.mxu0 0.0
    %159 = vmatprep.subr.mxu0 0.0
    %160 = vmatpush1.msra.mxu0 0.0
    %161 = vmatprep.subr.mxu0 0.0
    %162 = vmatpush1.msra.mxu0 0.0
    %163 = vmatprep.subr.mxu0 0.0
    %164 = vmatpush1.msra.mxu0 0.0
    %165 = vmatprep.subr.mxu0 0.0
    %166 = vmatpush1.msra.mxu0 0.0
    %167 = vmatprep.subr.mxu0 0.0
    %168 = vmatpush1.msra.mxu0 0.0
    %169 = vmatprep.subr.mxu0 0.0
    %170 = vmatpush1.msra.mxu0 0.0
    %171 = vmatprep.subr.mxu0 0.0
    %172 = vmatpush1.msra.mxu0 0.0
    %173 = vmatprep.subr.mxu0 0.0
    %174 = vmatpush1.msra.mxu0 0.0
    %175 = vmatprep.subr.mxu0 0.0
    %176 = vmatpush1.msra.mxu0 0.0
    %177 = vmatprep.mubr.f32.mxu0 0.0
    %178 = vmatmul.mubr.f32.gmra.mrb[0].mxu0 %v108
    %v179 = vpop.f32.mrb[0].mxu0
    %v180 = vadd.f32 0.0, %v179
    %v181 = vpop.f32.mrb[0].mxu0
    %182 = vdwg.mxu0
    %v184 = vsel %vm106, %v100, 0
    %v186 = vsel %vm110, %v97, 0
    %188 = vmatprep.subr.mxu0 0.0
    %189 = vmatpush1.msra.mxu0 %v186
    %190 = vmatprep.subr.mxu0 0.0
    %191 = vmatpush1.msra.mxu0 0.0
    %192 = vmatprep.subr.mxu0 0.0
    %193 = vmatpush1.msra.mxu0 0.0
    %194 = vmatprep.subr.mxu0 0.0
    %195 = vmatpush1.msra.mxu0 0.0
    %196 = vmatprep.subr.mxu0 0.0
    %197 = vmatpush1.msra.mxu0 0.0
    %198 = vmatprep.subr.mxu0 0.0
    %199 = vmatpush1.msra.mxu0 0.0
    %200 = vmatprep.subr.mxu0 0.0
    %201 = vmatpush1.msra.mxu0 0.0
    %202 = vmatprep.subr.mxu0 0.0
    %203 = vmatpush1.msra.mxu0 0.0
    %204 = vmatprep.subr.mxu0 0.0
    %205 = vmatpush1.msra.mxu0 0.0
    %206 = vmatprep.subr.mxu0 0.0
    %207 = vmatpush1.msra.mxu0 0.0
    %208 = vmatprep.subr.mxu0 0.0
    %209 = vmatpush1.msra.mxu0 0.0
    %210 = vmatprep.subr.mxu0 0.0
    %211 = vmatpush1.msra.mxu0 0.0
    %212 = vmatprep.subr.mxu0 0.0
    %213 = vmatpush1.msra.mxu0 0.0
    %214 = vmatprep.subr.mxu0 0.0
    %215 = vmatpush1.msra.mxu0 0.0
    %216 = vmatprep.subr.mxu0 0.0
    %217 = vmatpush1.msra.mxu0 0.0
    %218 = vmatprep.subr.mxu0 0.0
    %219 = vmatpush1.msra.mxu0 0.0
    %220 = vmatprep.subr.mxu0 0.0
    %221 = vmatpush1.msra.mxu0 0.0
    %222 = vmatprep.subr.mxu0 0.0
    %223 = vmatpush1.msra.mxu0 0.0
    %224 = vmatprep.subr.mxu0 0.0
    %225 = vmatpush1.msra.mxu0 0.0
    %226 = vmatprep.subr.mxu0 0.0
    %227 = vmatpush1.msra.mxu0 0.0
    %228 = vmatprep.subr.mxu0 0.0
    %229 = vmatpush1.msra.mxu0 0.0
    %230 = vmatprep.subr.mxu0 0.0
    %231 = vmatpush1.msra.mxu0 0.0
    %232 = vmatprep.subr.mxu0 0.0
    %233 = vmatpush1.msra.mxu0 0.0
    %234 = vmatprep.subr.mxu0 0.0
    %235 = vmatpush1.msra.mxu0 0.0
    %236 = vmatprep.subr.mxu0 0.0
    %237 = vmatpush1.msra.mxu0 0.0
    %238 = vmatprep.subr.mxu0 0.0
    %239 = vmatpush1.msra.mxu0 0.0
    %240 = vmatprep.subr.mxu0 0.0
    %241 = vmatpush1.msra.mxu0 0.0
    %242 = vmatprep.subr.mxu0 0.0
    %243 = vmatpush1.msra.mxu0 0.0
    %244 = vmatprep.subr.mxu0 0.0
    %245 = vmatpush1.msra.mxu0 0.0
    %246 = vmatprep.subr.mxu0 0.0
    %247 = vmatpush1.msra.mxu0 0.0
    %248 = vmatprep.subr.mxu0 0.0
    %249 = vmatpush1.msra.mxu0 0.0
    %250 = vmatprep.subr.mxu0 0.0
    %251 = vmatpush1.msra.mxu0 0.0
    %252 = vmatprep.mubr.f32.mxu0 0.0
    %253 = vmatmul.mubr.f32.gmra.mrb[0].mxu0 %v184
    %v254 = vpop.f32.mrb[0].mxu0
    %v255 = vadd.f32 %v180, %v254
    %v256 = vpop.f32.mrb[0].mxu0
    %257 = vdwg.mxu0
    %s258 = scalar_lea.vmem %s2, 16
    %v259 = vld [vmem:[%s258] sm:$0xff]
    %260 = vrot.lane.b32.xlu0 %v97, 96
    %v261 = vpop.permute.xlu0 %260
    %v263 = vsel %vm106, %v259, 0
    %v265 = vsel %vm110, %v261, 0
    %267 = vmatprep.subr.mxu0 0.0
    %268 = vmatpush1.msra.mxu0 %v265
    %269 = vmatprep.subr.mxu0 0.0
    %270 = vmatpush1.msra.mxu0 0.0
    %271 = vmatprep.subr.mxu0 0.0
    %272 = vmatpush1.msra.mxu0 0.0
    %273 = vmatprep.subr.mxu0 0.0
    %274 = vmatpush1.msra.mxu0 0.0
    %275 = vmatprep.subr.mxu0 0.0
    %276 = vmatpush1.msra.mxu0 0.0
    %277 = vmatprep.subr.mxu0 0.0
    %278 = vmatpush1.msra.mxu0 0.0
    %279 = vmatprep.subr.mxu0 0.0
    %280 = vmatpush1.msra.mxu0 0.0
    %281 = vmatprep.subr.mxu0 0.0
    %282 = vmatpush1.msra.mxu0 0.0
    %283 = vmatprep.subr.mxu0 0.0
    %284 = vmatpush1.msra.mxu0 0.0
    %285 = vmatprep.subr.mxu0 0.0
    %286 = vmatpush1.msra.mxu0 0.0
    %287 = vmatprep.subr.mxu0 0.0
    %288 = vmatpush1.msra.mxu0 0.0
    %289 = vmatprep.subr.mxu0 0.0
    %290 = vmatpush1.msra.mxu0 0.0
    %291 = vmatprep.subr.mxu0 0.0
    %292 = vmatpush1.msra.mxu0 0.0
    %293 = vmatprep.subr.mxu0 0.0
    %294 = vmatpush1.msra.mxu0 0.0
    %295 = vmatprep.subr.mxu0 0.0
    %296 = vmatpush1.msra.mxu0 0.0
    %297 = vmatprep.subr.mxu0 0.0
    %298 = vmatpush1.msra.mxu0 0.0
    %299 = vmatprep.subr.mxu0 0.0
    %300 = vmatpush1.msra.mxu0 0.0
    %301 = vmatprep.subr.mxu0 0.0
    %302 = vmatpush1.msra.mxu0 0.0
    %303 = vmatprep.subr.mxu0 0.0
    %304 = vmatpush1.msra.mxu0 0.0
    %305 = vmatprep.subr.mxu0 0.0
    %306 = vmatpush1.msra.mxu0 0.0
    %307 = vmatprep.subr.mxu0 0.0
    %308 = vmatpush1.msra.mxu0 0.0
    %309 = vmatprep.subr.mxu0 0.0
    %310 = vmatpush1.msra.mxu0 0.0
    %311 = vmatprep.subr.mxu0 0.0
    %312 = vmatpush1.msra.mxu0 0.0
    %313 = vmatprep.subr.mxu0 0.0
    %314 = vmatpush1.msra.mxu0 0.0
    %315 = vmatprep.subr.mxu0 0.0
    %316 = vmatpush1.msra.mxu0 0.0
    %317 = vmatprep.subr.mxu0 0.0
    %318 = vmatpush1.msra.mxu0 0.0
    %319 = vmatprep.subr.mxu0 0.0
    %320 = vmatpush1.msra.mxu0 0.0
    %321 = vmatprep.subr.mxu0 0.0
    %322 = vmatpush1.msra.mxu0 0.0
    %323 = vmatprep.subr.mxu0 0.0
    %324 = vmatpush1.msra.mxu0 0.0
    %325 = vmatprep.subr.mxu0 0.0
    %326 = vmatpush1.msra.mxu0 0.0
    %327 = vmatprep.subr.mxu0 0.0
    %328 = vmatpush1.msra.mxu0 0.0
    %329 = vmatprep.subr.mxu0 0.0
    %330 = vmatpush1.msra.mxu0 0.0
    %331 = vmatprep.mubr.f32.mxu0 0.0
    %332 = vmatmul.mubr.f32.gmra.mrb[0].mxu0 %v263
    %v333 = vpop.f32.mrb[0].mxu0
    %v334 = vadd.f32 0.0, %v333
    %v335 = vpop.f32.mrb[0].mxu0
    %336 = vdwg.mxu0
    %v337 = vadd.f32 %v255, %v334
    %v338 = vld [vmem:[%s3] sm:$0xff]
    %340 = vset.pattern.permute.xlu0 0
    %341 = vperm.xlu0 %340, %v338
    %v342 = vpop.permute.xlu0 %341
    %v344 = vmul.f32 %v337, %v342
    %v345 = vld [vmem:[%s4] sm:$0xff]
    %347 = vset.pattern.permute.xlu0 0
    %348 = vperm.xlu0 %347, %v345
    %v349 = vpop.permute.xlu0 %348
    %v351 = vadd.f32 %v344, %v349
    %v352 = vsub.f32 0.0, %v351
    %v353 = vmul.f32 %v352, 1.442695
    %v354 = vpow.pop %v353
    %v355 = vadd.f32 %v354, 1.0
    %v356 = vrcp.pop %v355
    %v357 = vmul.f32 %v351, %v356
    %vm358 = vcmask 130048
    %359 = vst.msk [vmem:[#allocation2] sm:$0xff] %vm358, %v357
    // Predicated region
    $region22: #{tpu_custom_call.1} parent=1 // pred_check
      _
    $region23: #{tpu_custom_call.1} parent=1 // pred_check_branch
      %361 = sbr.rel (0) target = $region25
    $region24: #{tpu_custom_call.1} parent=1 // pred_region
      %s363 = ssub.s32 128, 128
      %364 = vsyncadd [#allocation3], %s363
      %s366 = sshll.u32 [#allocation2], 4
      %s367 = int_to_ptr.vmem [resolvable:$true] %s366
      %369 = dma.vmem_to_hbm [thread:$0]  %s367, 128, %s5, [#allocation3]
    $region25: #{tpu_custom_call.1} parent=1 // pred_fallthru
      _
    // Predicated region
    $region26: #{tpu_custom_call.1} parent=1 // pred_check
      _
    $region27: #{tpu_custom_call.1} parent=1 // pred_check_branch
      %371 = sbr.rel (0) target = $region29
    $region28: #{tpu_custom_call.1} parent=1 // pred_region
      %372 = dma.done [#allocation3], 128
    $region29: #{tpu_custom_call.1} parent=1 // pred_fallthru
      _
    %373 = vsyncpa [#allocation3], 1

</llo_original>
